<compile_context>
chip_gen: v5e
topology: v5e:2x2
jax: 0.10.0
libtpu: 0.0.40
codegen_flags: <defaults>
</compile_context>

<pallas_src>
import functools
import math

import jax
import jax.numpy as jnp
from jax.experimental import pallas as pl
from jax.experimental.pallas import tpu as pltpu


# ----------------------------------------------------------------------------
# Sinusoidal PE table (identical math to the torch __init__).
# ----------------------------------------------------------------------------
def build_pe_table(d_model: int, max_len: int) -> jnp.ndarray:
    position = jnp.arange(0, max_len, dtype=jnp.float32)[:, None]            # (L, 1)
    div_term = jnp.exp(
        jnp.arange(0.0, d_model, 2.0, dtype=jnp.float32)
        * -(math.log(10000.0) / d_model)
    )                                                                         # (D/2,)
    angles = position * div_term                                              # (L, D/2)
    pe = jnp.zeros((max_len, d_model), dtype=jnp.float32)
    pe = pe.at[:, 0::2].set(jnp.sin(angles))
    pe = pe.at[:, 1::2].set(jnp.cos(angles))
    return pe[None, :, :]                                                     # (1, L, D)


# ----------------------------------------------------------------------------
# Kernels.  All dropout constants are plain Python numbers so the kernel body
# never captures concrete jnp arrays (the previous version's failure mode).
# ----------------------------------------------------------------------------
def _add_kernel(x_ref, pe_ref, o_ref):
    o_ref[...] = (x_ref[...] + pe_ref[...]).astype(o_ref.dtype)


def _make_dropout_bits_kernel(p: float):
    """Inverted dropout driven by an externally supplied uint8 random stream."""
    scale = 1.0 / (1.0 - p)                       # python float -> jaxpr literal
    thr = min(int(round(p * 256.0)), 255)         # python int   -> jaxpr literal
    # keep iff bits >= thr  ->  P(keep) = (256 - thr)/256 ~= 1 - p
    # (p -> 1 degenerates to keep-prob 1/256 instead of 0; pathological only)

    def kernel(x_ref, pe_ref, bits_ref, o_ref):
        y = x_ref[...] + pe_ref[...]
        keep = bits_ref[...].astype(jnp.int32) >= thr
        o_ref[...] = jnp.where(keep, y * scale, 0.0).astype(o_ref.dtype)

    return kernel


def _make_dropout_hwprng_kernel(p: float):
    """Inverted dropout with in-kernel hardware PRNG (no bits HBM stream).

    TODO(synk): make this the default path once pltpu.prng_seed /
    prng_random_bits are confirmed to lower in the interpret/test environment.
    """
    scale = 1.0 / (1.0 - p)
    thr = min(int(round(p * 4294967296.0)), 4294967295)

    def kernel(x_ref, pe_ref, seed_ref, o_ref):
        # Mix the per-call seed with both grid coordinates so every tile (and
        # every batch element) draws a distinct random stream.
        pltpu.prng_seed(seed_ref[0], pl.program_id(0), pl.program_id(1))
        bits = pltpu.bitcast(pltpu.prng_random_bits(x_ref.shape), jnp.uint32)
        y = x_ref[...] + pe_ref[...]
        keep = bits >= thr
        o_ref[...] = jnp.where(keep, y * scale, 0.0).astype(o_ref.dtype)

    return kernel


# ----------------------------------------------------------------------------
# Tile-size selection.
# ----------------------------------------------------------------------------
def _pick_rows(n_rows: int, lane: int, has_bits: bool, batch: int) -> int:
    """Rows (second-minor dim) per block.

    Sized so the double-buffered working set of all streams stays inside a
    ~16 MiB budget (covered by the explicit 32 MiB vmem_limit, safe on
    v5e/v6e/v7x), while targeting 1-2 MiB per f32 tile so the ~0.35 us
    per-grid-step overhead is amortized.
    """
    row_align = 32 if has_bits else 8            # uint8 packs 4 rows / sublane
    bytes_per_row = 3 * lane * 4 + (lane if has_bits else 0)
    budget = 16 * 1024 * 1024
    rt = budget // (2 * bytes_per_row)            # /2: double-buffered
    rt = min(rt, 4096)
    rt = max(row_align, (rt // row_align) * row_align)
    if rt >= n_rows:
        rt = n_rows                               # full extent: exempt from /8 rule
        if batch == 1 and n_rows >= 2 * row_align:
            # Keep >= 2 grid steps so both v7x TensorCores get work.
            half = (n_rows + 1) // 2
            rt = ((half + row_align - 1) // row_align) * row_align
    return rt


# ----------------------------------------------------------------------------
# Wrapper.
# ----------------------------------------------------------------------------
@functools.partial(jax.jit, static_argnames=("dropout", "training", "use_hw_prng"))
def positional_encoding(x, pe, key, *, dropout: float, training: bool,
                        use_hw_prng: bool = False):
    """x: (B, S, D) f32; pe: (1, max_len, D) f32; key: jax PRNG key (dropout)."""
    B, S, D = x.shape
    assert pe.shape[0] == 1 and pe.shape[2] == D and pe.shape[1] >= S

    apply_dropout = bool(training) and dropout > 0.0
    pe_s = pe[:, :S, :]                           # (1, S, D): exact rows needed

    # Lane-dense view: fold (S, D) into rows of exactly 128 lanes when D is
    # narrow, so stores are full-width (no masked partial stores).
    flat = (D % 128 != 0) and ((S * D) % 128 == 0)
    if flat:
        n_rows, lane = (S * D) // 128, 128
        xw = x.reshape(B, n_rows, lane)
        pew = pe_s.reshape(1, n_rows, lane)
    else:
        n_rows, lane = S, D
        xw, pew = x, pe_s

    rt = _pick_rows(n_rows, lane, apply_dropout and not use_hw_prng, B)
    grid = (pl.cdiv(n_rows, rt), B)               # batch innermost: pe tile is
                                                  # reused in VMEM across batch
    blk = (1, rt, lane)
    x_spec = pl.BlockSpec(blk, lambda r, b: (b, r, 0))
    pe_spec = pl.BlockSpec(blk, lambda r, b: (0, r, 0))
    out_spec = pl.BlockSpec(blk, lambda r, b: (b, r, 0))

    operands = [xw, pew]
    in_specs = [x_spec, pe_spec]
    if apply_dropout:
        if use_hw_prng:
            kernel = _make_dropout_hwprng_kernel(float(dropout))
            seed = jax.random.randint(key, (1,), 0, 2**31 - 1, dtype=jnp.int32)
            operands.append(seed)
            in_specs.append(pl.BlockSpec(memory_space=pltpu.MemorySpace.SMEM))
        else:
            kernel = _make_dropout_bits_kernel(float(dropout))
            bits = jax.random.bits(key, xw.shape, dtype=jnp.uint8)
            operands.append(bits)
            in_specs.append(pl.BlockSpec(blk, lambda r, b: (b, r, 0)))
    else:
        kernel = _add_kernel

    elems = B * S * D
    bytes_accessed = 2 * elems * 4 + S * D * 4
    if apply_dropout and not use_hw_prng:
        bytes_accessed += elems
    cost = pl.CostEstimate(flops=elems * (3 if apply_dropout else 1),
                           transcendentals=0,
                           bytes_accessed=bytes_accessed)

    out = pl.pallas_call(
        kernel,
        out_shape=jax.ShapeDtypeStruct(xw.shape, x.dtype),
        grid=grid,
        in_specs=in_specs,
        out_specs=out_spec,
        input_output_aliases={0: 0},              # out reuses x's HBM buffer
        cost_estimate=cost,
        compiler_params=pltpu.CompilerParams(
            dimension_semantics=("parallel", "parallel"),
            vmem_limit_bytes=32 * 1024 * 1024,
        ),
    )(*operands)

    return out.reshape(B, S, D) if flat else out


if __name__ == "__main__":
    B, S, D = 2, 8, 32
    MAX_LEN = 64
    DROPOUT = 0.1

    root = jax.random.PRNGKey(0)
    kx, kdrop = jax.random.split(root)
    x = jax.random.normal(kx, (B, S, D), dtype=jnp.float32)
    pe = build_pe_table(D, MAX_LEN)

    # Eval mode: dropout is identity -> deterministic reference check.
    out = positional_encoding(x, pe, kdrop, dropout=DROPOUT, training=False)
    out = jax.block_until_ready(out)
    ref = x + pe[:, :S]
    assert out.shape == (B, S, D) and out.dtype == jnp.float32
    assert jnp.allclose(out, ref, atol=1e-6, rtol=1e-6)

    # Training mode: every element is either 0 or (x+pe)/(1-p).
    out_train = positional_encoding(x, pe, kdrop, dropout=DROPOUT, training=True)
    out_train = jax.block_until_ready(out_train)
    scaled = ref / (1.0 - DROPOUT)
    ok = jnp.all(
        jnp.isclose(out_train, 0.0, atol=1e-6)
        | jnp.isclose(out_train, scaled, atol=1e-5, rtol=1e-5)
    )
    assert bool(ok)
    keep_frac = float(jnp.mean((out_train != 0.0).astype(jnp.float32)))
    assert 0.7 <= keep_frac <= 1.0   # ~= 1 - p (uint8 granularity: 230/256)

    print("KERNEL_OK")
</pallas_src>

<mosaic_0001>
module attributes {stable_mosaic.version = 11 : i64} {
  func.func @_add_kernel(%arg0: i32, %arg1: i32, %arg2: memref<1x2x128xf32, #tpu.memory_space<vmem>>, %arg3: memref<1x2x128xf32, #tpu.memory_space<vmem>>, %arg4: memref<1x2x128xf32, #tpu.memory_space<vmem>>) attributes {dimension_semantics = [#tpu.dimension_semantics<parallel>, #tpu.dimension_semantics<parallel>], iteration_bounds = array<i64: 1, 2>, scalar_prefetch = 0 : i64, scratch_operands = 0 : i64, tpu.core_type = #tpu.core_type<tc>, window_params = [{transform_indices = @transform_0, window_bounds = array<i64: 1, 2, 128>}, {transform_indices = @transform_1, window_bounds = array<i64: 1, 2, 128>}, {transform_indices = @transform_2, window_bounds = array<i64: 1, 2, 128>}]} {
    %c0 = arith.constant 0 : index
    %c0_0 = arith.constant 0 : index
    %c0_1 = arith.constant 0 : index
    %0 = vector.load %arg2[%c0, %c0_0, %c0_1] : memref<1x2x128xf32, #tpu.memory_space<vmem>>, vector<1x2x128xf32>
    %c0_2 = arith.constant 0 : index
    %c0_3 = arith.constant 0 : index
    %c0_4 = arith.constant 0 : index
    %1 = vector.load %arg3[%c0_2, %c0_3, %c0_4] : memref<1x2x128xf32, #tpu.memory_space<vmem>>, vector<1x2x128xf32>
    %2 = arith.addf %0, %1 : vector<1x2x128xf32>
    %c0_5 = arith.constant 0 : index
    %c0_6 = arith.constant 0 : index
    %c0_7 = arith.constant 0 : index
    %3 = vector.load %arg4[%c0_5, %c0_6, %c0_7] : memref<1x2x128xf32, #tpu.memory_space<vmem>>, vector<1x2x128xf32>
    tpu.vector_store %arg4[%c0_5, %c0_6, %c0_7], %2 {strides = array<i32>} : memref<1x2x128xf32, #tpu.memory_space<vmem>>, vector<1x2x128xf32>,
    return
  }
  func.func @transform_0(%arg0: i32, %arg1: i32) -> (i32, i32, i32) {
    %c0_i32 = arith.constant 0 : i32
    %c0_i32_0 = arith.constant 0 : i32
    return %arg1, %arg0, %c0_i32 : i32, i32, i32
  }
  func.func @transform_1(%arg0: i32, %arg1: i32) -> (i32, i32, i32) {
    %c0_i32 = arith.constant 0 : i32
    %c0_i32_0 = arith.constant 0 : i32
    %c0_i32_1 = arith.constant 0 : i32
    return %c0_i32, %arg0, %c0_i32_0 : i32, i32, i32
  }
  func.func @transform_2(%arg0: i32, %arg1: i32) -> (i32, i32, i32) {
    %c0_i32 = arith.constant 0 : i32
    %c0_i32_0 = arith.constant 0 : i32
    return %arg1, %arg0, %c0_i32 : i32, i32, i32
  }
}

</mosaic_0001>

<llo_original>
// kernel: positional_encoding.1
$region0: #{positional_encoding.1}
  #allocation0 [shape = 'u32[]', space=smem, size = 0x4, offset = 0x4, fixed_abs, tag = 'smem constant byte address 0x4 - core index']
  #allocation1 [shape = 'u32[72,128]{1,0:T(1,128)}', space=vmem, size = 0x9000, scoped, tag = 'internal scratch']
  %s0 = inlined_call_operand.vmem [shape: f32[2,2,128], index: 0, kind: input, shape index: {}, may-alias: {0,2}]
  %s1 = inlined_call_operand.vmem [shape: f32[1,2,128], index: 1, kind: input, shape index: {}]
  %s2 = inlined_call_operand.vmem [shape: f32[2,2,128], index: 2, kind: output, shape index: {}, may-alias: {0,2}]
  %s3 = sld [smem:[#allocation0]]
  $region41: #{positional_encoding.1} parent=0
    _
  %s5 = ssub.s32 1, %s3
  %s6 = scalar_select 0, %s5, %s3
  loop: start=0, step=1, limit=4
  $region2: #{positional_encoding.1} parent=0 // loop_pre_header
    _
  $region3: #{positional_encoding.1} parent=0 // loop_header
    %s8 = sphi 0, %s12
    %p9 = scmp.ge.s32.totalorder %s8, 4
    %s15 = sphi 0, %s27
    %s16 = sphi 0, %s23
    %s17 = sphi 0, %s15
    %s18 = sphi 0, %s16
    %s19 = sphi 0, %s17
    %s20 = sphi 0, %s18
    %s32 = sphi 0, %s34
    %s35 = sphi 0, %s32
    %s36 = sphi 0, %s35
    %s52 = sphi 0, %s36
    %s58 = sphi 0, %s60
    %s61 = sphi 0, %s58
    %s62 = sphi 0, %s61
    %s78 = sphi 0, %s62
    %s86 = sphi 0, %s88
    %s89 = sphi 0, %s86
    %s90 = sphi 0, %s89
    %s106 = sphi 0, %s90
  $region4: #{positional_encoding.1} parent=0 // loop_header_branch
    %11 = sbr.rel (%p9) target = $region8
  $region5: #{positional_encoding.1} parent=0 // loop_body
    %s13 = ssub.s32 %s8, 1
    %s14 = ssub.s32 %s8, 2
    %s21 = sadd.s32 1, %s16
    %p22 = scmp.ge.s32.totalorder %s21, 2
    %s23 = scalar_select %p22, 0, %s21
    %s24 = sadd.s32 1, %s15
    %s25 = scalar_select %p22, %s24, %s15
    %p26 = scmp.ge.s32.totalorder %s25, 1
    %s27 = scalar_select %p26, 0, %s25
    %s28 = ssub.s32 %s16, %s23
    %s29 = ssub.s32 %s15, %s27
    %s30 = sor.u32 %s28, %s29
    %p31 = scmp.eq.s32.totalorder %s30, 0
    %s33 = sadd.s32 %s32, 1
    %s34 = scalar_select %p31, %s32, %s33
    %p37 = pneg %p31
    %p38 = scmp.eq.s32.totalorder %s8, 1
    %p39 = por %p37, %p38
    %p40 = scmp.ne.s32.totalorder %s32, %s35
    %p41 = scmp.eq.s32.totalorder %s8, 0
    %p42 = por %p40, %p41
    %p43 = scmp.ne.s32.totalorder %s32, %s35
    %p44 = scmp.eq.s32.totalorder %s13, 1
    %p45 = por %p43, %p44
    %p46 = scmp.ne.s32.totalorder %s35, %s36
    %p47 = scmp.eq.s32.totalorder %s13, 0
    %p48 = por %p46, %p47
    %p49 = scmp.ne.s32.totalorder %s35, %s36
    %p50 = scmp.eq.s32.totalorder %s14, 1
    %p51 = por %p49, %p50
    %p53 = scmp.ne.s32.totalorder %s36, %s52
    %p54 = scmp.eq.s32.totalorder %s14, 0
    %p55 = por %p53, %p54
    %s56 = ssub.s32 %s15, %s27
    %p57 = scmp.eq.s32.totalorder %s56, 0
    %s59 = sadd.s32 %s58, 1
    %s60 = scalar_select %p57, %s58, %s59
    %p63 = pneg %p57
    %p64 = scmp.eq.s32.totalorder %s8, 1
    %p65 = por %p63, %p64
    %p66 = scmp.ne.s32.totalorder %s58, %s61
    %p67 = scmp.eq.s32.totalorder %s8, 0
    %p68 = por %p66, %p67
    %p69 = scmp.ne.s32.totalorder %s58, %s61
    %p70 = scmp.eq.s32.totalorder %s13, 1
    %p71 = por %p69, %p70
    %p72 = scmp.ne.s32.totalorder %s61, %s62
    %p73 = scmp.eq.s32.totalorder %s13, 0
    %p74 = por %p72, %p73
    %p75 = scmp.ne.s32.totalorder %s61, %s62
    %p76 = scmp.eq.s32.totalorder %s14, 1
    %p77 = por %p75, %p76
    %p79 = scmp.ne.s32.totalorder %s62, %s78
    %p80 = scmp.eq.s32.totalorder %s14, 0
    %p81 = por %p79, %p80
    %s82 = ssub.s32 %s16, %s23
    %s83 = ssub.s32 %s15, %s27
    %s84 = sor.u32 %s82, %s83
    %p85 = scmp.eq.s32.totalorder %s84, 0
    %s87 = sadd.s32 %s86, 1
    %s88 = scalar_select %p85, %s86, %s87
    %p91 = pneg %p85
    %p92 = scmp.eq.s32.totalorder %s8, 1
    %p93 = por %p91, %p92
    %p94 = scmp.ne.s32.totalorder %s86, %s89
    %p95 = scmp.eq.s32.totalorder %s8, 0
    %p96 = por %p94, %p95
    %p97 = scmp.ne.s32.totalorder %s86, %s89
    %p98 = scmp.eq.s32.totalorder %s13, 1
    %p99 = por %p97, %p98
    %p100 = scmp.ne.s32.totalorder %s89, %s90
    %p101 = scmp.eq.s32.totalorder %s13, 0
    %p102 = por %p100, %p101
    %p103 = scmp.ne.s32.totalorder %s89, %s90
    %p104 = scmp.eq.s32.totalorder %s14, 1
    %p105 = por %p103, %p104
    %p107 = scmp.ne.s32.totalorder %s90, %s106
    %p108 = scmp.eq.s32.totalorder %s14, 0
    %p109 = por %p107, %p108
    %p110 = scmp.le.s32.totalorder 1, %s8
    %p111 = scmp.lt.s32.totalorder %s8, 3
    %p112 = pnand %p110, %p111
    %p113 = pneg %p112
    // Predicated region
    $region9: #{positional_encoding.1} parent=5 // pred_check
      _
    $region10: #{positional_encoding.1} parent=5 // pred_check_branch
      %115 = sbr.rel (%p112) target = $region12
    $region11: #{positional_encoding.1} parent=5 // pred_region
      %s116 = ssub.s32 %s8, 1
      // Predicated region
      $region13: #{positional_encoding.1} parent=11 // pred_check
        %p117 = pneg %p74
      $region14: #{positional_encoding.1} parent=11 // pred_check_branch
        %119 = sbr.rel (%p117) target = $region16
      $region15: #{positional_encoding.1} parent=11 // pred_region
        %p120 = scmp.lt.s32.totalorder %s17, 0
        %s121 = scalar_select %p120, %s17, 0
        %s122 = smul.addr %s121, 2
        %s123 = scalar_lea.vmem %s1, %s122
      $region16: #{positional_encoding.1} parent=11 // pred_fallthru
        _
    $region12: #{positional_encoding.1} parent=5 // pred_fallthru
      _
    %p124 = scmp.lt.s32.totalorder %s8, 2
    // Predicated region
    $region17: #{positional_encoding.1} parent=5 // pred_check
      %p125 = pneg %p124
    $region18: #{positional_encoding.1} parent=5 // pred_check_branch
      %127 = sbr.rel (%p125) target = $region20
    $region19: #{positional_encoding.1} parent=5 // pred_region
      // Predicated region
      $region21: #{positional_encoding.1} parent=19 // pred_check
        %p128 = pneg %p42
      $region22: #{positional_encoding.1} parent=19 // pred_check_branch
        %130 = sbr.rel (%p128) target = $region24
      $region23: #{positional_encoding.1} parent=19 // pred_region
        %p131 = scmp.lt.s32.totalorder %s16, 1
        %s132 = scalar_select %p131, %s16, 1
        %p133 = scmp.lt.s32.totalorder %s15, 0
        %s134 = scalar_select %p133, %s15, 0
        %s135 = sadd.s32 %s134, %s132
        %s136 = smul.addr %s135, 2
        %s137 = scalar_lea.vmem %s0, %s136
      $region24: #{positional_encoding.1} parent=19 // pred_fallthru
        _
    $region20: #{positional_encoding.1} parent=5 // pred_fallthru
      _
    %p138 = scmp.le.s32.totalorder 1, %s8
    %p139 = scmp.lt.s32.totalorder %s8, 3
    %p140 = pnand %p138, %p139
    %p141 = pneg %p140
    // Predicated region
    $region25: #{positional_encoding.1} parent=5 // pred_check
      _
    $region26: #{positional_encoding.1} parent=5 // pred_check_branch
      %143 = sbr.rel (%p140) target = $region28
    $region27: #{positional_encoding.1} parent=5 // pred_region
      %s144 = ssub.s32 %s8, 1
      %p145 = scmp.lt.s32.totalorder %s18, 1
      %s146 = scalar_select %p145, %s18, 1
      %p147 = scmp.lt.s32.totalorder %s17, 0
      %s148 = scalar_select %p147, %s17, 0
      %s149 = sadd.s32 %s148, %s146
      %s150 = smul.addr %s149, 2
      %s151 = scalar_lea.vmem %s0, %s150
      %p152 = pneg %p48
      %p153 = pneg %p45
      %p154 = scmp.lt.s32.totalorder %s17, 0
      %s155 = scalar_select %p154, %s17, 0
      %s156 = smul.addr %s155, 2
      %s157 = scalar_lea.vmem %s1, %s156
      %p158 = pneg %p74
      %p159 = pneg %p71
      %p160 = pneg %p102
      %p161 = pneg %p99
      %p162 = scmp.lt.s32.totalorder %s18, 1
      %s163 = scalar_select %p162, %s18, 1
      %p164 = scmp.lt.s32.totalorder %s17, 0
      %s165 = scalar_select %p164, %s17, 0
      %s166 = sadd.s32 %s165, %s163
      %s167 = smul.addr %s166, 2
      %s168 = scalar_lea.vmem %s2, %s167
      %p169 = scmp.lt.s32.totalorder %s18, 1
      %s170 = scalar_select %p169, %s18, 1
      %p171 = scmp.lt.s32.totalorder %s17, 0
      %s172 = scalar_select %p171, %s17, 0
      %s173 = sadd.s32 %s172, %s170
      %s174 = smul.addr %s173, 2
      %s175 = scalar_lea.vmem %s0, %s174
      %p176 = scmp.lt.s32.totalorder %s17, 0
      %s177 = scalar_select %p176, %s17, 0
      %s178 = smul.addr %s177, 2
      %s179 = scalar_lea.vmem %s1, %s178
      %p180 = scmp.lt.s32.totalorder %s18, 1
      %s181 = scalar_select %p180, %s18, 1
      %p182 = scmp.lt.s32.totalorder %s17, 0
      %s183 = scalar_select %p182, %s17, 0
      %s184 = sadd.s32 %s183, %s181
      %s185 = smul.addr %s184, 2
      %s186 = scalar_lea.vmem %s2, %s185
      %v187 = vld [vmem:[%s175] sm:$0x3]
      %v188 = vld [vmem:[%s179] sm:$0x3]
      %v189 = vadd.f32 %v187, %v188
      %190 = vst [vmem:[%s186] sm:$0x3] %v189
      %p191 = scmp.lt.s32.totalorder %s18, 1
      %s192 = scalar_select %p191, %s18, 1
      %p193 = scmp.lt.s32.totalorder %s17, 0
      %s194 = scalar_select %p193, %s17, 0
      %s195 = sadd.s32 %s194, %s192
      %s196 = smul.addr %s195, 2
      %s197 = scalar_lea.vmem %s2, %s196
      // Predicated region
      $region29: #{positional_encoding.1} parent=27 // pred_check
        %p198 = pneg %p99
      $region30: #{positional_encoding.1} parent=27 // pred_check_branch
        %200 = sbr.rel (%p198) target = $region32
      $region31: #{positional_encoding.1} parent=27 // pred_region
        _
      $region32: #{positional_encoding.1} parent=27 // pred_fallthru
        _
    $region28: #{positional_encoding.1} parent=5 // pred_fallthru
      _
    %p201 = scmp.le.s32.totalorder 2, %s8
    // Predicated region
    $region33: #{positional_encoding.1} parent=5 // pred_check
      %p202 = pneg %p201
    $region34: #{positional_encoding.1} parent=5 // pred_check_branch
      %204 = sbr.rel (%p202) target = $region36
    $region35: #{positional_encoding.1} parent=5 // pred_region
      %s205 = ssub.s32 %s8, 2
      // Predicated region
      $region37: #{positional_encoding.1} parent=35 // pred_check
        %p206 = pneg %p105
      $region38: #{positional_encoding.1} parent=35 // pred_check_branch
        %208 = sbr.rel (%p206) target = $region40
      $region39: #{positional_encoding.1} parent=35 // pred_region
        %p209 = scmp.lt.s32.totalorder %s20, 1
        %s210 = scalar_select %p209, %s20, 1
        %p211 = scmp.lt.s32.totalorder %s19, 0
        %s212 = scalar_select %p211, %s19, 0
        %s213 = sadd.s32 %s212, %s210
        %s214 = smul.addr %s213, 2
        %s215 = scalar_lea.vmem %s2, %s214
      $region40: #{positional_encoding.1} parent=35 // pred_fallthru
        _
    $region36: #{positional_encoding.1} parent=5 // pred_fallthru
      _
  $region6: #{positional_encoding.1} parent=0 // loop_footer
    %s12 = sadd.s32 1, %s8
  $region7: #{positional_encoding.1} parent=0 // loop_footer_branch
    %7 = sbr.rel target = $region3
  $region8: #{positional_encoding.1} parent=0 // loop_exit
    _

</llo_original>
